<compile_context>
chip_gen: v5e
topology: v5e:2x2
jax: 0.10.0
libtpu: 0.0.40
codegen_flags: <defaults>
</compile_context>

<pallas_src>
import functools

import jax
import jax.numpy as jnp
from jax.experimental import pallas as pl
from jax.experimental.pallas import tpu as pltpu

EPS = 1e-6


def _normalizator_kernel(alpha_ref, gamma_ref, x_ref, o_ref, *, d_model, g):
    """Normalize a (tile_rows, g*d_model) tile.

    Each packed row holds `g` logical rows of width d_model laid side-by-side
    along lanes, so both the load and the store are lane-dense whenever g > 1.
    Stats are computed per d_model-wide segment with static lane slices; the g
    normalized slabs are concatenated so the output is one dense store.
    """
    x = x_ref[...].astype(jnp.float32)
    alpha = alpha_ref[0]
    gamma = gamma_ref[0]
    outs = []
    for j in range(g):  # g is a small Python int -> unrolled at trace time.
        xs = x[:, j * d_model:(j + 1) * d_model]
        mean = jnp.mean(xs, axis=-1, keepdims=True)
        diff = xs - mean
        # torch.std(dim=-1) is unbiased -> divide by (N - 1). d_model == 1
        # divides by zero (PyTorch also yields nan/inf there).
        var = jnp.sum(diff * diff, axis=-1, keepdims=True) / jnp.float32(d_model - 1)
        # approx=False is an exact divide (NOT the cheap EUP vrcp path); the
        # cost is per-row only and keeps 1e-5 parity with the PyTorch math.
        inv = pl.reciprocal(jnp.sqrt(var) + jnp.float32(EPS), approx=False)
        outs.append(diff * (alpha * inv) + gamma)
    out = outs[0] if g == 1 else jnp.concatenate(outs, axis=-1)
    o_ref[...] = out.astype(o_ref.dtype)


def normalizator(x, alpha, gamma, *, tile_rows=None, target_tile_bytes=None,
                 core_parallel=False):
    """Pallas implementation of Normalizator.forward over the last axis.

    x: [..., d_model]; alpha, gamma: shape-(1,) float32 parameters (SMEM).
    tile_rows / target_tile_bytes control the row tiling; core_parallel=True
    shards the grid axis across TensorCores on multi-TC parts (v7x).
    """
    orig_shape = x.shape
    d_model = int(orig_shape[-1])
    rows = 1
    for s in orig_shape[:-1]:
        rows *= int(s)

    # Lane-dense repacking: pack g = 128 // d_model logical rows per packed row
    # (free, row-major-contiguous reshape) so the block last dim is a multiple
    # of 128 and stores are unmasked dense vst.
    g = 1
    if 0 < d_model < 128 and 128 % d_model == 0:
        cand = 128 // d_model
        if rows % cand == 0:
            g = cand
    packed_rows = rows // g
    packed_d = g * d_model
    x2d = x.reshape(packed_rows, packed_d)

    itemsize = jnp.dtype(x.dtype).itemsize

    # Generation-aware sizing.
    try:
        vmem_cap = int(pltpu.get_tpu_info().vmem_capacity_bytes)
    except Exception:  # conservative fallback = smallest generation (v7x)
        vmem_cap = 64 << 20
    if target_tile_bytes is None:
        # v7x (64 MiB VMEM, 3.2 TB/s HBM) wants ~8 MiB tiles to amortize the
        # ~0.35 us/grid-step overhead; 128 MiB parts (v5e/v6e) use ~6 MiB.
        target_tile_bytes = (8 << 20) if vmem_cap <= (64 << 20) else (6 << 20)

    # Dtype-native sublane multiple: 8 rows f32, 16 bf16, 32 int8/fp8.
    sublane = 8 * max(1, 4 // itemsize)
    if tile_rows is None:
        tile_rows = max(sublane, target_tile_bytes // (packed_d * itemsize))
    tile_rows = max(sublane, (int(tile_rows) // sublane) * sublane)
    rows_rounded = ((packed_rows + sublane - 1) // sublane) * sublane
    tile_rows = min(tile_rows, rows_rounded)

    # Masked edge block handles packed_rows % tile_rows != 0 (no pad/slice).
    grid = (pl.cdiv(packed_rows, tile_rows),)

    tile_bytes = tile_rows * packed_d * itemsize
    # 2x double-buffered input + 2x double-buffered output + headroom, capped
    # at 75% of this generation's physical VMEM (48 MiB on v7x, 96 MiB else).
    vmem_limit = int(min(4 * tile_bytes + (16 << 20), (vmem_cap * 3) // 4))

    cost = pl.CostEstimate(
        flops=6 * rows * d_model,
        transcendentals=2 * rows,
        bytes_accessed=2 * rows * d_model * itemsize,
    )

    # v7x has 2 TensorCores; CORE_PARALLEL shards the row-tile axis across
    # them. Default off (plain parallel) so 1-TC parts are unaffected.
    dim_sem = (pltpu.CORE_PARALLEL,) if core_parallel else (pltpu.PARALLEL,)

    kernel = functools.partial(_normalizator_kernel, d_model=d_model, g=g)
    out2d = pl.pallas_call(
        kernel,
        out_shape=jax.ShapeDtypeStruct((packed_rows, packed_d), x.dtype),
        grid=grid,
        in_specs=[
            pl.BlockSpec(memory_space=pltpu.MemorySpace.SMEM),  # alpha
            pl.BlockSpec(memory_space=pltpu.MemorySpace.SMEM),  # gamma
            pl.BlockSpec((tile_rows, packed_d), lambda i: (i, 0)),
        ],
        out_specs=pl.BlockSpec((tile_rows, packed_d), lambda i: (i, 0)),
        compiler_params=pltpu.CompilerParams(
            dimension_semantics=dim_sem,
            vmem_limit_bytes=vmem_limit),
        cost_estimate=cost,
    )(alpha, gamma, x2d)

    return out2d.reshape(orig_shape)


def decoder_forward(tgt_input, encoder_output, cross_mask, training_step,
                    training_mode, *, layers, alpha, gamma):
    """Mirrors Decoder.forward: sequentially apply `layers`, then Normalizator."""
    current = tgt_input
    for layer in layers:
        current = layer(current, encoder_output, cross_mask, training_step,
                        training_mode)
    return normalizator(current, alpha, gamma)


def _reference_normalizator(x, alpha, gamma):
    x = x.astype(jnp.float32)
    mean = jnp.mean(x, axis=-1, keepdims=True)
    d = x.shape[-1]
    var = jnp.sum((x - mean) ** 2, axis=-1, keepdims=True) / (d - 1)
    std = jnp.sqrt(var)
    return alpha[0] * (x - mean) / (std + EPS) + gamma[0]


if __name__ == "__main__":
    key = jax.random.PRNGKey(0)
    k1, k2, k3 = jax.random.split(key, 3)

    batch, seq, d_model = 2, 8, 32
    tgt_input = jax.random.normal(k1, (batch, seq, d_model), dtype=jnp.float32)
    encoder_output = jax.random.normal(k2, (batch, seq, d_model),
                                       dtype=jnp.float32)
    cross_mask = jnp.ones((batch, 1, seq, seq), dtype=jnp.float32)

    # Normalizator parameters, deterministic init as in __init__.
    alpha = jnp.ones((1,), dtype=jnp.float32)   # torch.ones(1)
    gamma = jnp.zeros((1,), dtype=jnp.float32)  # torch.zeros(1)

    # Externally supplied decoder layers are undefined in the source; use
    # pass-through layers with the same call signature.
    def identity_layer(x, enc, mask, step, mode):
        return x

    layers = [identity_layer, identity_layer]

    fwd = functools.partial(decoder_forward, layers=layers,
                            alpha=alpha, gamma=gamma)

    # Main path: d_model=32 -> lane-dense packed path (g=4, blocks of width 128).
    out = jax.block_until_ready(fwd(tgt_input, encoder_output, cross_mask, 0, False))
    ref = _reference_normalizator(tgt_input, alpha, gamma)
    assert out.shape == tgt_input.shape
    assert jnp.allclose(out, ref, atol=1e-5, rtol=1e-5)

    # Ragged row count (rows % g != 0) -> lane-sparse fallback + masked edge block.
    x_ragged = jax.random.normal(k2, (3, 7, d_model), dtype=jnp.float32)
    out_ragged = jax.block_until_ready(
        normalizator(x_ragged, alpha, gamma, tile_rows=8))
    ref_ragged = _reference_normalizator(x_ragged, alpha, gamma)
    assert jnp.allclose(out_ragged, ref_ragged, atol=1e-5, rtol=1e-5)

    # bf16 activations -> 16-row sublane rounding + packed path (g=2).
    x_bf16 = jax.random.normal(k3, (2, 16, 64), dtype=jnp.float32).astype(jnp.bfloat16)
    out_bf16 = jax.block_until_ready(normalizator(x_bf16, alpha, gamma))
    ref_bf16 = _reference_normalizator(x_bf16.astype(jnp.float32), alpha, gamma)
    assert jnp.allclose(out_bf16.astype(jnp.float32), ref_bf16,
                        atol=5e-2, rtol=5e-2)

    print("KERNEL_OK")
</pallas_src>

<mosaic_0001>
module attributes {stable_mosaic.version = 11 : i64} {
  func.func @_normalizator_kernel(%arg0: i32, %arg1: memref<1xf32, #tpu.memory_space<smem>>, %arg2: memref<1xf32, #tpu.memory_space<smem>>, %arg3: memref<8x128xf32, #tpu.memory_space<vmem>>, %arg4: memref<8x128xf32, #tpu.memory_space<vmem>>) attributes {dimension_semantics = [#tpu.dimension_semantics<parallel>], iteration_bounds = array<i64: 1>, scalar_prefetch = 0 : i64, scratch_operands = 0 : i64, tpu.core_type = #tpu.core_type<tc>, window_params = [{transform_indices = @transform_0, window_bounds = array<i64: 1>}, {transform_indices = @transform_1, window_bounds = array<i64: 1>}, {transform_indices = @transform_2, window_bounds = array<i64: 8, 128>}, {transform_indices = @transform_3, window_bounds = array<i64: 8, 128>}]} {
    %c0 = arith.constant 0 : index
    %c0_0 = arith.constant 0 : index
    %0 = vector.load %arg3[%c0, %c0_0] : memref<8x128xf32, #tpu.memory_space<vmem>>, vector<8x128xf32>
    %c0_1 = arith.constant 0 : index
    %1 = memref.load %arg1[%c0_1] : memref<1xf32, #tpu.memory_space<smem>>
    %c0_2 = arith.constant 0 : index
    %2 = memref.load %arg2[%c0_2] : memref<1xf32, #tpu.memory_space<smem>>
    %3 = vector.extract_strided_slice %0 {offsets = [0, 0], sizes = [8, 32], strides = [1, 1]} : vector<8x128xf32> to vector<8x32xf32>
    %cst = arith.constant dense<0.000000e+00> : vector<8xf32>
    %4 = vector.multi_reduction <add>, %3, %cst [1] : vector<8x32xf32> to vector<8xf32>
    %5 = vector.shape_cast %4 : vector<8xf32> to vector<8x1xf32>
    %cst_3 = arith.constant 3.200000e+01 : f32
    %6 = vector.broadcast %cst_3 : f32 to vector<8x1xf32>
    %7 = arith.divf %5, %6 : vector<8x1xf32>
    %8 = vector.broadcast %7 : vector<8x1xf32> to vector<8x32xf32>
    %9 = arith.subf %3, %8 : vector<8x32xf32>
    %10 = arith.mulf %9, %9 : vector<8x32xf32>
    %cst_4 = arith.constant dense<0.000000e+00> : vector<8xf32>
    %11 = vector.multi_reduction <add>, %10, %cst_4 [1] : vector<8x32xf32> to vector<8xf32>
    %12 = vector.shape_cast %11 : vector<8xf32> to vector<8x1xf32>
    %cst_5 = arith.constant 3.100000e+01 : f32
    %13 = vector.broadcast %cst_5 : f32 to vector<8x1xf32>
    %14 = arith.divf %12, %13 : vector<8x1xf32>
    %15 = math.sqrt %14 : vector<8x1xf32>
    %cst_6 = arith.constant 9.99999997E-7 : f32
    %16 = vector.broadcast %cst_6 : f32 to vector<8x1xf32>
    %17 = arith.addf %15, %16 : vector<8x1xf32>
    %18 = tpu.reciprocal %17 : vector<8x1xf32> -> vector<8x1xf32>
    %19 = vector.broadcast %1 : f32 to vector<8x1xf32>
    %20 = arith.mulf %19, %18 : vector<8x1xf32>
    %21 = vector.broadcast %20 : vector<8x1xf32> to vector<8x32xf32>
    %22 = arith.mulf %9, %21 : vector<8x32xf32>
    %23 = vector.broadcast %2 : f32 to vector<8x32xf32>
    %24 = arith.addf %22, %23 : vector<8x32xf32>
    %25 = vector.extract_strided_slice %0 {offsets = [0, 32], sizes = [8, 32], strides = [1, 1]} : vector<8x128xf32> to vector<8x32xf32>
    %cst_7 = arith.constant dense<0.000000e+00> : vector<8xf32>
    %26 = vector.multi_reduction <add>, %25, %cst_7 [1] : vector<8x32xf32> to vector<8xf32>
    %27 = vector.shape_cast %26 : vector<8xf32> to vector<8x1xf32>
    %cst_8 = arith.constant 3.200000e+01 : f32
    %28 = vector.broadcast %cst_8 : f32 to vector<8x1xf32>
    %29 = arith.divf %27, %28 : vector<8x1xf32>
    %30 = vector.broadcast %29 : vector<8x1xf32> to vector<8x32xf32>
    %31 = arith.subf %25, %30 : vector<8x32xf32>
    %32 = arith.mulf %31, %31 : vector<8x32xf32>
    %cst_9 = arith.constant dense<0.000000e+00> : vector<8xf32>
    %33 = vector.multi_reduction <add>, %32, %cst_9 [1] : vector<8x32xf32> to vector<8xf32>
    %34 = vector.shape_cast %33 : vector<8xf32> to vector<8x1xf32>
    %cst_10 = arith.constant 3.100000e+01 : f32
    %35 = vector.broadcast %cst_10 : f32 to vector<8x1xf32>
    %36 = arith.divf %34, %35 : vector<8x1xf32>
    %37 = math.sqrt %36 : vector<8x1xf32>
    %cst_11 = arith.constant 9.99999997E-7 : f32
    %38 = vector.broadcast %cst_11 : f32 to vector<8x1xf32>
    %39 = arith.addf %37, %38 : vector<8x1xf32>
    %40 = tpu.reciprocal %39 : vector<8x1xf32> -> vector<8x1xf32>
    %41 = vector.broadcast %1 : f32 to vector<8x1xf32>
    %42 = arith.mulf %41, %40 : vector<8x1xf32>
    %43 = vector.broadcast %42 : vector<8x1xf32> to vector<8x32xf32>
    %44 = arith.mulf %31, %43 : vector<8x32xf32>
    %45 = vector.broadcast %2 : f32 to vector<8x32xf32>
    %46 = arith.addf %44, %45 : vector<8x32xf32>
    %47 = vector.extract_strided_slice %0 {offsets = [0, 64], sizes = [8, 32], strides = [1, 1]} : vector<8x128xf32> to vector<8x32xf32>
    %cst_12 = arith.constant dense<0.000000e+00> : vector<8xf32>
    %48 = vector.multi_reduction <add>, %47, %cst_12 [1] : vector<8x32xf32> to vector<8xf32>
    %49 = vector.shape_cast %48 : vector<8xf32> to vector<8x1xf32>
    %cst_13 = arith.constant 3.200000e+01 : f32
    %50 = vector.broadcast %cst_13 : f32 to vector<8x1xf32>
    %51 = arith.divf %49, %50 : vector<8x1xf32>
    %52 = vector.broadcast %51 : vector<8x1xf32> to vector<8x32xf32>
    %53 = arith.subf %47, %52 : vector<8x32xf32>
    %54 = arith.mulf %53, %53 : vector<8x32xf32>
    %cst_14 = arith.constant dense<0.000000e+00> : vector<8xf32>
    %55 = vector.multi_reduction <add>, %54, %cst_14 [1] : vector<8x32xf32> to vector<8xf32>
    %56 = vector.shape_cast %55 : vector<8xf32> to vector<8x1xf32>
    %cst_15 = arith.constant 3.100000e+01 : f32
    %57 = vector.broadcast %cst_15 : f32 to vector<8x1xf32>
    %58 = arith.divf %56, %57 : vector<8x1xf32>
    %59 = math.sqrt %58 : vector<8x1xf32>
    %cst_16 = arith.constant 9.99999997E-7 : f32
    %60 = vector.broadcast %cst_16 : f32 to vector<8x1xf32>
    %61 = arith.addf %59, %60 : vector<8x1xf32>
    %62 = tpu.reciprocal %61 : vector<8x1xf32> -> vector<8x1xf32>
    %63 = vector.broadcast %1 : f32 to vector<8x1xf32>
    %64 = arith.mulf %63, %62 : vector<8x1xf32>
    %65 = vector.broadcast %64 : vector<8x1xf32> to vector<8x32xf32>
    %66 = arith.mulf %53, %65 : vector<8x32xf32>
    %67 = vector.broadcast %2 : f32 to vector<8x32xf32>
    %68 = arith.addf %66, %67 : vector<8x32xf32>
    %69 = vector.extract_strided_slice %0 {offsets = [0, 96], sizes = [8, 32], strides = [1, 1]} : vector<8x128xf32> to vector<8x32xf32>
    %cst_17 = arith.constant dense<0.000000e+00> : vector<8xf32>
    %70 = vector.multi_reduction <add>, %69, %cst_17 [1] : vector<8x32xf32> to vector<8xf32>
    %71 = vector.shape_cast %70 : vector<8xf32> to vector<8x1xf32>
    %cst_18 = arith.constant 3.200000e+01 : f32
    %72 = vector.broadcast %cst_18 : f32 to vector<8x1xf32>
    %73 = arith.divf %71, %72 : vector<8x1xf32>
    %74 = vector.broadcast %73 : vector<8x1xf32> to vector<8x32xf32>
    %75 = arith.subf %69, %74 : vector<8x32xf32>
    %76 = arith.mulf %75, %75 : vector<8x32xf32>
    %cst_19 = arith.constant dense<0.000000e+00> : vector<8xf32>
    %77 = vector.multi_reduction <add>, %76, %cst_19 [1] : vector<8x32xf32> to vector<8xf32>
    %78 = vector.shape_cast %77 : vector<8xf32> to vector<8x1xf32>
    %cst_20 = arith.constant 3.100000e+01 : f32
    %79 = vector.broadcast %cst_20 : f32 to vector<8x1xf32>
    %80 = arith.divf %78, %79 : vector<8x1xf32>
    %81 = math.sqrt %80 : vector<8x1xf32>
    %cst_21 = arith.constant 9.99999997E-7 : f32
    %82 = vector.broadcast %cst_21 : f32 to vector<8x1xf32>
    %83 = arith.addf %81, %82 : vector<8x1xf32>
    %84 = tpu.reciprocal %83 : vector<8x1xf32> -> vector<8x1xf32>
    %85 = vector.broadcast %1 : f32 to vector<8x1xf32>
    %86 = arith.mulf %85, %84 : vector<8x1xf32>
    %87 = vector.broadcast %86 : vector<8x1xf32> to vector<8x32xf32>
    %88 = arith.mulf %75, %87 : vector<8x32xf32>
    %89 = vector.broadcast %2 : f32 to vector<8x32xf32>
    %90 = arith.addf %88, %89 : vector<8x32xf32>
    %91 = tpu.concatenate %24, %46, %68, %90 in 1 : vector<8x32xf32>, vector<8x32xf32>, vector<8x32xf32>, vector<8x32xf32> -> vector<8x128xf32>
    %c0_22 = arith.constant 0 : index
    %c0_23 = arith.constant 0 : index
    %92 = vector.load %arg4[%c0_22, %c0_23] : memref<8x128xf32, #tpu.memory_space<vmem>>, vector<8x128xf32>
    tpu.vector_store %arg4[%c0_22, %c0_23], %91 {strides = array<i32>} : memref<8x128xf32, #tpu.memory_space<vmem>>, vector<8x128xf32>,
    return
  }
  func.func @transform_0(%arg0: i32) -> i32 {
    %c0_i32 = arith.constant 0 : i32
    %c0_i32_0 = arith.constant 0 : i32
    return %c0_i32 : i32
  }
  func.func @transform_1(%arg0: i32) -> i32 {
    %c0_i32 = arith.constant 0 : i32
    %c0_i32_0 = arith.constant 0 : i32
    return %c0_i32 : i32
  }
  func.func @transform_2(%arg0: i32) -> (i32, i32) {
    %c0_i32 = arith.constant 0 : i32
    %c0_i32_0 = arith.constant 0 : i32
    return %arg0, %c0_i32 : i32, i32
  }
  func.func @transform_3(%arg0: i32) -> (i32, i32) {
    %c0_i32 = arith.constant 0 : i32
    %c0_i32_0 = arith.constant 0 : i32
    return %arg0, %c0_i32 : i32, i32
  }
}

</mosaic_0001>

<llo_original>
// kernel: tpu_custom_call.1
$region0: #{tpu_custom_call.1}
  #allocation0 [shape = 'u32[]', space=smem, size = 0x4, offset = 0x4, fixed_abs, tag = 'smem constant byte address 0x4 - core index']
  #allocation1 [shape = 'u32[72,128]{1,0:T(1,128)}', space=vmem, size = 0x9000, scoped, tag = 'internal scratch']
  #allocation2 [shape = 'f32[1]{0:T(128)S(6)}', space=smem, size = 0x200, scoped, tag = 'scoped memory for tpu_custom_call.1']
  #allocation3 [shape = 'f32[1]{0:T(128)S(6)}', space=smem, size = 0x200, scoped, tag = 'scoped memory for tpu_custom_call.1']
  %s0 = inlined_call_operand.<no memory space> [shape: f32[1], index: 0, kind: input, shape index: {}]
  %s1 = inlined_call_operand.<no memory space> [shape: f32[1], index: 1, kind: input, shape index: {}]
  %s2 = inlined_call_operand.vmem [shape: f32[4,128], index: 2, kind: input, shape index: {}]
  %s3 = inlined_call_operand.hbm [shape: f32[4,128], index: 3, kind: output, shape index: {}]
  %s4 = sld [smem:[#allocation0]]
  $region22: #{tpu_custom_call.1} parent=0
    _
  %s6 = ssub.s32 1, %s4
  %s7 = scalar_select 0, %s6, %s4
  %8 = sst [smem:[#allocation2]] %s0
  %9 = sst [smem:[#allocation3]] %s1
  $region1: #{tpu_custom_call.1} parent=0
    #allocation4 [shape = 'u8[4096]{0}', space=vmem, size = 0x1000, scoped, tag = 'output window, operand 0, single buffered']
    #allocation5 [shape = 's32[1]{0}', space=sflag, size = 0x4, scoped, tag = 'scoped memory for tpu_custom_call.1']
    %10 = vsyncpa [#allocation5], 0
    // Predicated region
    $region2: #{tpu_custom_call.1} parent=1 // pred_check
      _
    $region3: #{tpu_custom_call.1} parent=1 // pred_check_branch
      %12 = sbr.rel (0) target = $region5
    $region4: #{tpu_custom_call.1} parent=1 // pred_region
      _
    $region5: #{tpu_custom_call.1} parent=1 // pred_fallthru
      _
    // Predicated region
    $region6: #{tpu_custom_call.1} parent=1 // pred_check
      _
    $region7: #{tpu_custom_call.1} parent=1 // pred_check_branch
      %14 = sbr.rel (0) target = $region9
    $region8: #{tpu_custom_call.1} parent=1 // pred_region
      _
    $region9: #{tpu_custom_call.1} parent=1 // pred_fallthru
      _
    // Predicated region
    $region10: #{tpu_custom_call.1} parent=1 // pred_check
      _
    $region11: #{tpu_custom_call.1} parent=1 // pred_check_branch
      %16 = sbr.rel (0) target = $region13
    $region12: #{tpu_custom_call.1} parent=1 // pred_region
      _
    $region13: #{tpu_custom_call.1} parent=1 // pred_fallthru
      _
    %v17 = vld [vmem:[%s2] sm:$0xff]
    %s18 = sld [smem:[#allocation2]]
    %s19 = sld [smem:[#allocation3]]
    %vm20 = vcmask 261120
    %v21 = vsel %vm20, %v17, 0.0
    %22 = vadd.xlane.f32.xlu0 %v21
    %v23 = vpop.xlane.xlu0 %22
    %v24 = vrcp.pop 32.0
    %v25 = vmul.f32 32.0, %v24
    %v26 = vsub.f32 1.0, %v25
    %v27 = vmul.f32 %v24, %v26
    %v28 = vadd.f32 %v24, %v27
    %vm29 = vweird.f32 %v24
    %v30 = vsel %vm29, %v24, %v28
    %v31 = vmul.f32 %v23, %v30
    %v32 = vsub.f32 %v17, %v31
    %v33 = vmul.f32 %v32, %v32
    %v34 = vsel %vm20, %v33, 0.0
    %35 = vadd.xlane.f32.xlu0 %v34
    %v36 = vpop.xlane.xlu0 %35
    %v37 = vrcp.pop 31.0
    %v38 = vmul.f32 31.0, %v37
    %v39 = vsub.f32 1.0, %v38
    %v40 = vmul.f32 %v37, %v39
    %v41 = vadd.f32 %v37, %v40
    %vm42 = vweird.f32 %v37
    %v43 = vsel %vm42, %v37, %v41
    %v44 = vmul.f32 %v36, %v43
    %v45 = vrsqrt.pop %v44
    %v46 = vmul.f32 %v45, %v44
    %v47 = vmul.f32 %v46, %v45
    %v48 = vmul.f32 0.5, %v47
    %v49 = vsub.f32 1.5, %v48
    %v50 = vmul.f32 %v45, %v49
    %v51 = vmul.f32 %v44, %v50
    %vm52 = vcmp.eq.f32.partialorder %v44, inf
    %v53 = vsel %vm52, %v44, %v51
    %vm54 = vcmp.eq.f32.partialorder %v44, 0.0
    %v55 = vand.u32 %v44, 2147483648
    %v56 = vsel %vm54, %v55, %v53
    %v57 = vadd.f32 %v56, 1e-06
    %v58 = vrcp.pop %v57
    %v59 = vmul.f32 %v57, %v58
    %v60 = vsub.f32 1.0, %v59
    %v61 = vmul.f32 %v58, %v60
    %v62 = vadd.f32 %v58, %v61
    %vm63 = vweird.f32 %v57
    %vm64 = vweird.f32 %v58
    %vm65 = vmor %vm63, %vm64
    %v66 = vsel %vm65, %v58, %v62
    %v67 = vand.u32 2147483647, %v57
    %vm68 = vcmp.eq.f32.partialorder %v67, 8.507059e+37
    %v69 = vand.u32 %v57, 2147483648
    %v70 = vor.u32 1.1754944e-38, %v69
    %v71 = vsel %vm68, %v70, %v66
    %v72 = vstv %s18
    %v73 = vmul.f32 %v72, %v71
    %v74 = vmul.f32 %v32, %v73
    %v75 = vstv %s19
    %v76 = vadd.f32 %v74, %v75
    %78 = vrot.lane.b32.xlu0 %v17, 96
    %v79 = vpop.permute.xlu0 %78
    %v81 = vsel %vm20, %v79, 0.0
    %82 = vadd.xlane.f32.xlu0 %v81
    %v83 = vpop.xlane.xlu0 %82
    %v84 = vmul.f32 %v83, %v30
    %v85 = vsub.f32 %v17, %v84
    %v86 = vmul.f32 %v85, %v85
    %88 = vrot.lane.b32.xlu0 %v86, 96
    %v89 = vpop.permute.xlu0 %88
    %v91 = vsel %vm20, %v89, 0.0
    %92 = vadd.xlane.f32.xlu0 %v91
    %v93 = vpop.xlane.xlu0 %92
    %v94 = vmul.f32 %v93, %v43
    %v95 = vrsqrt.pop %v94
    %v96 = vmul.f32 %v95, %v94
    %v97 = vmul.f32 %v96, %v95
    %v98 = vmul.f32 0.5, %v97
    %v99 = vsub.f32 1.5, %v98
    %v100 = vmul.f32 %v95, %v99
    %v101 = vmul.f32 %v94, %v100
    %vm102 = vcmp.eq.f32.partialorder %v94, inf
    %v103 = vsel %vm102, %v94, %v101
    %vm104 = vcmp.eq.f32.partialorder %v94, 0.0
    %v105 = vand.u32 %v94, 2147483648
    %v106 = vsel %vm104, %v105, %v103
    %v107 = vadd.f32 %v106, 1e-06
    %v108 = vrcp.pop %v107
    %v109 = vmul.f32 %v107, %v108
    %v110 = vsub.f32 1.0, %v109
    %v111 = vmul.f32 %v108, %v110
    %v112 = vadd.f32 %v108, %v111
    %vm113 = vweird.f32 %v107
    %vm114 = vweird.f32 %v108
    %vm115 = vmor %vm113, %vm114
    %v116 = vsel %vm115, %v108, %v112
    %v117 = vand.u32 2147483647, %v107
    %vm118 = vcmp.eq.f32.partialorder %v117, 8.507059e+37
    %v119 = vand.u32 %v107, 2147483648
    %v120 = vor.u32 1.1754944e-38, %v119
    %v121 = vsel %vm118, %v120, %v116
    %v122 = vmul.f32 %v72, %v121
    %v123 = vmul.f32 %v85, %v122
    %v124 = vadd.f32 %v123, %v75
    %125 = vrot.lane.b32.xlu0 %v17, 64
    %v126 = vpop.permute.xlu0 %125
    %v128 = vsel %vm20, %v126, 0.0
    %129 = vadd.xlane.f32.xlu0 %v128
    %v130 = vpop.xlane.xlu0 %129
    %v131 = vmul.f32 %v130, %v30
    %v132 = vsub.f32 %v17, %v131
    %v133 = vmul.f32 %v132, %v132
    %135 = vrot.lane.b32.xlu0 %v133, 64
    %v136 = vpop.permute.xlu0 %135
    %v138 = vsel %vm20, %v136, 0.0
    %139 = vadd.xlane.f32.xlu0 %v138
    %v140 = vpop.xlane.xlu0 %139
    %v141 = vmul.f32 %v140, %v43
    %v142 = vrsqrt.pop %v141
    %v143 = vmul.f32 %v142, %v141
    %v144 = vmul.f32 %v143, %v142
    %v145 = vmul.f32 0.5, %v144
    %v146 = vsub.f32 1.5, %v145
    %v147 = vmul.f32 %v142, %v146
    %v148 = vmul.f32 %v141, %v147
    %vm149 = vcmp.eq.f32.partialorder %v141, inf
    %v150 = vsel %vm149, %v141, %v148
    %vm151 = vcmp.eq.f32.partialorder %v141, 0.0
    %v152 = vand.u32 %v141, 2147483648
    %v153 = vsel %vm151, %v152, %v150
    %v154 = vadd.f32 %v153, 1e-06
    %v155 = vrcp.pop %v154
    %v156 = vmul.f32 %v154, %v155
    %v157 = vsub.f32 1.0, %v156
    %v158 = vmul.f32 %v155, %v157
    %v159 = vadd.f32 %v155, %v158
    %vm160 = vweird.f32 %v154
    %vm161 = vweird.f32 %v155
    %vm162 = vmor %vm160, %vm161
    %v163 = vsel %vm162, %v155, %v159
    %v164 = vand.u32 2147483647, %v154
    %vm165 = vcmp.eq.f32.partialorder %v164, 8.507059e+37
    %v166 = vand.u32 %v154, 2147483648
    %v167 = vor.u32 1.1754944e-38, %v166
    %v168 = vsel %vm165, %v167, %v163
    %v169 = vmul.f32 %v72, %v168
    %v170 = vmul.f32 %v132, %v169
    %v171 = vadd.f32 %v170, %v75
    %172 = vrot.lane.b32.xlu0 %v17, 32
    %v173 = vpop.permute.xlu0 %172
    %v175 = vsel %vm20, %v173, 0.0
    %176 = vadd.xlane.f32.xlu0 %v175
    %v177 = vpop.xlane.xlu0 %176
    %v178 = vmul.f32 %v177, %v30
    %v179 = vsub.f32 %v17, %v178
    %v180 = vmul.f32 %v179, %v179
    %182 = vrot.lane.b32.xlu0 %v180, 32
    %v183 = vpop.permute.xlu0 %182
    %v185 = vsel %vm20, %v183, 0.0
    %186 = vadd.xlane.f32.xlu0 %v185
    %v187 = vpop.xlane.xlu0 %186
    %v188 = vmul.f32 %v187, %v43
    %v189 = vrsqrt.pop %v188
    %v190 = vmul.f32 %v189, %v188
    %v191 = vmul.f32 %v190, %v189
    %v192 = vmul.f32 0.5, %v191
    %v193 = vsub.f32 1.5, %v192
    %v194 = vmul.f32 %v189, %v193
    %v195 = vmul.f32 %v188, %v194
    %vm196 = vcmp.eq.f32.partialorder %v188, inf
    %v197 = vsel %vm196, %v188, %v195
    %vm198 = vcmp.eq.f32.partialorder %v188, 0.0
    %v199 = vand.u32 %v188, 2147483648
    %v200 = vsel %vm198, %v199, %v197
    %v201 = vadd.f32 %v200, 1e-06
    %v202 = vrcp.pop %v201
    %v203 = vmul.f32 %v201, %v202
    %v204 = vsub.f32 1.0, %v203
    %v205 = vmul.f32 %v202, %v204
    %v206 = vadd.f32 %v202, %v205
    %vm207 = vweird.f32 %v201
    %vm208 = vweird.f32 %v202
    %vm209 = vmor %vm207, %vm208
    %v210 = vsel %vm209, %v202, %v206
    %v211 = vand.u32 2147483647, %v201
    %vm212 = vcmp.eq.f32.partialorder %v211, 8.507059e+37
    %v213 = vand.u32 %v201, 2147483648
    %v214 = vor.u32 1.1754944e-38, %v213
    %v215 = vsel %vm212, %v214, %v210
    %v216 = vmul.f32 %v72, %v215
    %v217 = vmul.f32 %v179, %v216
    %v218 = vadd.f32 %v217, %v75
    %v219 = vsel %vm20, %v76, %v124
    %vm220 = vcmask 523264
    %v221 = vsel %vm220, %v219, %v171
    %vm222 = vcmask 785408
    %v223 = vsel %vm222, %v221, %v218
    %224 = vst [vmem:[#allocation4] sm:$0xff] %v223
    // Predicated region
    $region14: #{tpu_custom_call.1} parent=1 // pred_check
      _
    $region15: #{tpu_custom_call.1} parent=1 // pred_check_branch
      %226 = sbr.rel (0) target = $region17
    $region16: #{tpu_custom_call.1} parent=1 // pred_region
      %228 = vsyncadd [#allocation5], 64
      %s229 = sshll.u32 [#allocation4], 4
      %s230 = int_to_ptr.vmem [resolvable:$true] %s229
      %s231 = sshll.u32 %s3, 4
      %s232 = int_to_ptr.hbm [resolvable:$true] %s231
      %237 = dma.vmem_to_hbm [thread:$0]  %s230, 64, %s232, [#allocation5], 64, 64, 4
    $region17: #{tpu_custom_call.1} parent=1 // pred_fallthru
      _
    // Predicated region
    $region18: #{tpu_custom_call.1} parent=1 // pred_check
      _
    $region19: #{tpu_custom_call.1} parent=1 // pred_check_branch
      %239 = sbr.rel (0) target = $region21
    $region20: #{tpu_custom_call.1} parent=1 // pred_region
      %241 = dma.done [#allocation5], 128
    $region21: #{tpu_custom_call.1} parent=1 // pred_fallthru
      _
    %242 = vsyncpa [#allocation5], 1

</llo_original>
